<compile_context>
chip_gen: v6e
topology: v6e:2x2x1
jax: 0.10.0
libtpu: 0.0.40
codegen_flags: <defaults>
</compile_context>

<pallas_src>
import functools

import jax
import jax.numpy as jnp
from jax.experimental import pallas as pl
from jax.experimental.pallas import tpu as pltpu

# Fixed Laplacian filter (deterministic "parameters" of LaplacianPenalty).
_LAP_FILTER = (
    (0.5, 1.0, 0.5),
    (1.0, -6.0, 1.0),
    (0.5, 1.0, 0.5),
)


def _crossfield_smooth_block_kernel(x_ref, out_ref, xpad_ref):
    """One grid step: partial sum of |12 * depthwise_laplacian| for a block.

    x_ref    : (nc_b, H, W)      input block, native dtype, VMEM
    out_ref  : (1, 8, 128) f32   lane-dense partial-sum tile, VMEM
    xpad_ref : (nc_b, H+2, W+2)  f32 scratch used to build the padded tile
    """
    nc_b, h, w = x_ref.shape

    x = x_ref[...]
    if x_ref.dtype != jnp.float32:
        x = x.astype(jnp.float32)  # upcast after DMA; input streamed narrow.

    # Build the zero-padded tile entirely in VMEM (padding never touches HBM).
    xpad_ref[...] = jnp.zeros_like(xpad_ref)
    xpad_ref[:, 1:h + 1, 1:w + 1] = x
    xp = xpad_ref[...]  # (nc_b, H+2, W+2) f32

    # Separable factorization:
    #   12 * L = 0.5 * outer([1,2,1], [1,2,1]) - 8 * delta_center
    # Column (lane-axis) blur with zero padding:
    c1 = xp[:, :, 1:w + 1]
    t = xp[:, :, 0:w] + (c1 + c1) + xp[:, :, 2:w + 2]        # (nc_b, H+2, W)
    # Row (sublane-axis) blur with zero padding:
    r1 = t[:, 1:h + 1, :]
    blur = t[:, 0:h, :] + (r1 + r1) + t[:, 2:h + 2, :]       # (nc_b, H, W)
    # 12x the depthwise Laplacian response.
    lap12 = 0.5 * blur - 8.0 * x

    part = jnp.sum(jnp.abs(lap12))
    out_ref[...] = jnp.full(out_ref.shape, part, jnp.float32)


def _pick_nc_block(nc, h, w, budget_bytes):
    """Largest divisor of nc whose f32 working block fits the VMEM budget."""
    per_image_f32 = h * w * 4
    best = 1
    for d in range(1, nc + 1):
        if nc % d == 0 and d * per_image_f32 <= budget_bytes:
            best = d
    return best


def crossfield_smooth_loss(pre_crossfield, *, nc_block=None,
                           block_budget_bytes=2 * 1024 * 1024):
    """pre_crossfield: (N, C, H, W) float array (NCHW, C == 4). Returns scalar f32."""
    n, c, h, w = pre_crossfield.shape
    nc = n * c
    # Merging leading dims is a free (no-copy) reshape; no dtype pre-cast.
    x = pre_crossfield.reshape(nc, h, w)

    if nc_block is None:
        nc_block = _pick_nc_block(nc, h, w, block_budget_bytes)
    assert nc % nc_block == 0, (nc, nc_block)
    g = nc // nc_block

    partials = pl.pallas_call(
        _crossfield_smooth_block_kernel,
        out_shape=jax.ShapeDtypeStruct((g, 8, 128), jnp.float32),
        grid=(g,),
        in_specs=[pl.BlockSpec((nc_block, h, w), lambda i: (i, 0, 0))],
        out_specs=pl.BlockSpec((1, 8, 128), lambda i: (i, 0, 0)),
        scratch_shapes=[pltpu.VMEM((nc_block, h + 2, w + 2), jnp.float32)],
        compiler_params=pltpu.CompilerParams(
            dimension_semantics=("parallel",),
            vmem_limit_bytes=32 * 1024 * 1024,
        ),
    )(x)

    total = jnp.sum(partials[:, 0, 0])
    # kernel computed sum(|12 * conv|)  ->  mean(|conv|) = total / (12 * N*C*H*W)
    return total / jnp.float32(12.0 * nc * h * w)


def _reference_loss(pre_crossfield):
    """Pure-JAX reference: explicit 9-tap zero-padded depthwise conv + mean|.|."""
    x = pre_crossfield.astype(jnp.float32)
    n, c, h, w = x.shape
    xp = jnp.pad(x, ((0, 0), (0, 0), (1, 1), (1, 1)))
    filt = jnp.array(_LAP_FILTER, jnp.float32) / 12.0
    acc = jnp.zeros_like(x)
    for dy in range(3):
        for dx in range(3):
            acc = acc + filt[dy, dx] * xp[:, :, dy:dy + h, dx:dx + w]
    return jnp.mean(jnp.abs(acc))


if __name__ == "__main__":
    key = jax.random.PRNGKey(0)
    x = jax.random.normal(key, (2, 4, 16, 16), dtype=jnp.float32)

    ref = jax.block_until_ready(_reference_loss(x))

    # Default (heuristic) blocking: whole NC range in one block.
    loss = jax.block_until_ready(jax.jit(crossfield_smooth_loss)(x))
    assert jnp.allclose(loss, ref, rtol=1e-5, atol=1e-6), (loss, ref)

    # Forced smaller NC blocks -> multi-step "parallel" grid with per-block
    # partial sums reduced in JAX.
    loss_blk = jax.block_until_ready(
        jax.jit(functools.partial(crossfield_smooth_loss, nc_block=2))(x))
    assert jnp.allclose(loss_blk, ref, rtol=1e-5, atol=1e-6), (loss_blk, ref)

    # bf16 input: DMA'd narrow, upcast to f32 inside the kernel.
    x_bf16 = x.astype(jnp.bfloat16)
    ref_bf16 = jax.block_until_ready(_reference_loss(x_bf16))
    loss_bf16 = jax.block_until_ready(jax.jit(crossfield_smooth_loss)(x_bf16))
    assert jnp.allclose(loss_bf16, ref_bf16, rtol=1e-5, atol=1e-6), (
        loss_bf16, ref_bf16)

    print("KERNEL_OK")
</pallas_src>

<mosaic_0001>
module attributes {stable_mosaic.version = 11 : i64} {
  func.func @_crossfield_smooth_block_kernel(%arg0: i32, %arg1: memref<8x16x16xf32, #tpu.memory_space<vmem>>, %arg2: memref<1x8x128xf32, #tpu.memory_space<vmem>>, %arg3: memref<8x18x18xf32, #tpu.memory_space<vmem>>) attributes {dimension_semantics = [#tpu.dimension_semantics<parallel>], iteration_bounds = array<i64: 1>, scalar_prefetch = 0 : i64, scratch_operands = 1 : i64, tpu.core_type = #tpu.core_type<tc>, window_params = [{transform_indices = @transform_0, window_bounds = array<i64: 8, 16, 16>}, {transform_indices = @transform_1, window_bounds = array<i64: 1, 8, 128>}]} {
    %c0 = arith.constant 0 : index
    %c0_0 = arith.constant 0 : index
    %c0_1 = arith.constant 0 : index
    %0 = vector.load %arg1[%c0, %c0_0, %c0_1] : memref<8x16x16xf32, #tpu.memory_space<vmem>>, vector<8x16x16xf32>
    %cst = arith.constant 0.000000e+00 : f32
    %1 = vector.broadcast %cst : f32 to vector<8x18x18xf32>
    %c0_2 = arith.constant 0 : index
    %c0_3 = arith.constant 0 : index
    %c0_4 = arith.constant 0 : index
    %2 = vector.load %arg3[%c0_2, %c0_3, %c0_4] : memref<8x18x18xf32, #tpu.memory_space<vmem>>, vector<8x18x18xf32>
    tpu.vector_store %arg3[%c0_2, %c0_3, %c0_4], %1 {strides = array<i32>} : memref<8x18x18xf32, #tpu.memory_space<vmem>>, vector<8x18x18xf32>,
    %c0_5 = arith.constant 0 : index
    %c1 = arith.constant 1 : index
    %c1_6 = arith.constant 1 : index
    %3 = vector.load %arg3[%c0_5, %c1, %c1_6] : memref<8x18x18xf32, #tpu.memory_space<vmem>>, vector<8x16x16xf32>
    tpu.vector_store %arg3[%c0_5, %c1, %c1_6], %0 {strides = array<i32>} : memref<8x18x18xf32, #tpu.memory_space<vmem>>, vector<8x16x16xf32>,
    %c0_7 = arith.constant 0 : index
    %c0_8 = arith.constant 0 : index
    %c0_9 = arith.constant 0 : index
    %4 = vector.load %arg3[%c0_7, %c0_8, %c0_9] : memref<8x18x18xf32, #tpu.memory_space<vmem>>, vector<8x18x18xf32>
    %5 = vector.extract_strided_slice %4 {offsets = [0, 0, 1], sizes = [8, 18, 16], strides = [1, 1, 1]} : vector<8x18x18xf32> to vector<8x18x16xf32>
    %6 = vector.extract_strided_slice %4 {offsets = [0, 0, 0], sizes = [8, 18, 16], strides = [1, 1, 1]} : vector<8x18x18xf32> to vector<8x18x16xf32>
    %7 = arith.addf %5, %5 : vector<8x18x16xf32>
    %8 = arith.addf %6, %7 : vector<8x18x16xf32>
    %9 = vector.extract_strided_slice %4 {offsets = [0, 0, 2], sizes = [8, 18, 16], strides = [1, 1, 1]} : vector<8x18x18xf32> to vector<8x18x16xf32>
    %10 = arith.addf %8, %9 : vector<8x18x16xf32>
    %11 = vector.extract_strided_slice %10 {offsets = [0, 1, 0], sizes = [8, 16, 16], strides = [1, 1, 1]} : vector<8x18x16xf32> to vector<8x16x16xf32>
    %12 = vector.extract_strided_slice %10 {offsets = [0, 0, 0], sizes = [8, 16, 16], strides = [1, 1, 1]} : vector<8x18x16xf32> to vector<8x16x16xf32>
    %13 = arith.addf %11, %11 : vector<8x16x16xf32>
    %14 = arith.addf %12, %13 : vector<8x16x16xf32>
    %15 = vector.extract_strided_slice %10 {offsets = [0, 2, 0], sizes = [8, 16, 16], strides = [1, 1, 1]} : vector<8x18x16xf32> to vector<8x16x16xf32>
    %16 = arith.addf %14, %15 : vector<8x16x16xf32>
    %cst_10 = arith.constant 5.000000e-01 : f32
    %17 = vector.broadcast %cst_10 : f32 to vector<8x16x16xf32>
    %18 = arith.mulf %17, %16 : vector<8x16x16xf32>
    %cst_11 = arith.constant 8.000000e+00 : f32
    %19 = vector.broadcast %cst_11 : f32 to vector<8x16x16xf32>
    %20 = arith.mulf %19, %0 : vector<8x16x16xf32>
    %21 = arith.subf %18, %20 : vector<8x16x16xf32>
    %22 = math.absf %21 : vector<8x16x16xf32>
    %23 = vector.shape_cast %22 : vector<8x16x16xf32> to vector<1x8x16x16xf32>
    %cst_12 = arith.constant dense<0.000000e+00> : vector<1xf32>
    %24 = vector.multi_reduction <add>, %23, %cst_12 [1, 2, 3] : vector<1x8x16x16xf32> to vector<1xf32>
    %25 = vector.shape_cast %24 : vector<1xf32> to vector<1x1x1x1xf32>
    %26 = vector.extract %25[0, 0, 0, 0] : f32 from vector<1x1x1x1xf32>
    %27 = vector.broadcast %26 : f32 to vector<1x8x128xf32>
    %c0_13 = arith.constant 0 : index
    %c0_14 = arith.constant 0 : index
    %c0_15 = arith.constant 0 : index
    %28 = vector.load %arg2[%c0_13, %c0_14, %c0_15] : memref<1x8x128xf32, #tpu.memory_space<vmem>>, vector<1x8x128xf32>
    tpu.vector_store %arg2[%c0_13, %c0_14, %c0_15], %27 {strides = array<i32>} : memref<1x8x128xf32, #tpu.memory_space<vmem>>, vector<1x8x128xf32>,
    return
  }
  func.func @transform_0(%arg0: i32) -> (i32, i32, i32) {
    %c0_i32 = arith.constant 0 : i32
    %c0_i32_0 = arith.constant 0 : i32
    %c0_i32_1 = arith.constant 0 : i32
    return %arg0, %c0_i32, %c0_i32_0 : i32, i32, i32
  }
  func.func @transform_1(%arg0: i32) -> (i32, i32, i32) {
    %c0_i32 = arith.constant 0 : i32
    %c0_i32_0 = arith.constant 0 : i32
    %c0_i32_1 = arith.constant 0 : i32
    return %arg0, %c0_i32, %c0_i32_0 : i32, i32, i32
  }
}

</mosaic_0001>

<llo_original>
// kernel: crossfield_smooth_loss.1
$region0: #{crossfield_smooth_loss.1}
  #allocation0 [shape = 'u32[]', space=smem, size = 0x4, offset = 0x4, fixed_abs, tag = 'smem constant byte address 0x4 - core index']
  #allocation1 [shape = 'u32[144,128]{1,0:T(1,128)}', space=vmem, size = 0x12000, scoped, tag = 'internal scratch']
  #allocation2 [shape = 'f32[8,18,18]{2,1,0:T(8,128)}', space=vmem, size = 0x18000, scoped, tag = 'scratch operand']
  %s0 = inlined_call_operand.hbm [shape: f32[8,16,16], index: 0, kind: input, shape index: {}]
  %s1 = inlined_call_operand.vmem [shape: f32[1,8,128], index: 1, kind: output, shape index: {}]
  %s2 = sld [smem:[#allocation0]]
  $region18: #{crossfield_smooth_loss.1} parent=0
    _
  %s4 = ssub.s32 1, %s2
  %s5 = scalar_select 0, %s4, %s2
  $region1: #{crossfield_smooth_loss.1} parent=0
    #allocation3 [shape = 'u8[65536]{0}', space=vmem, size = 0x10000, scoped, tag = 'input window, operand 0, single buffered']
    #allocation4 [shape = 's32[1]{0}', space=sflag, size = 0x4, scoped, tag = 'scoped memory for crossfield_smooth_loss.1']
    %6 = vsyncpa [#allocation4], 0
    // Predicated region
    $region2: #{crossfield_smooth_loss.1} parent=1 // pred_check
      _
    $region3: #{crossfield_smooth_loss.1} parent=1 // pred_check_branch
      %8 = sbr.rel (0) target = $region5
    $region4: #{crossfield_smooth_loss.1} parent=1 // pred_region
      %s10 = ssub.s32 2048, 2048
      %11 = vsyncadd [#allocation4], %s10
      %s12 = sshll.u32 [#allocation3], 4
      %s13 = int_to_ptr.vmem [resolvable:$true] %s12
      %18 = dma.hbm_to_vmem [thread:$0]  %s0, 2048, %s13, [#allocation4], 128, 128, 8
    $region5: #{crossfield_smooth_loss.1} parent=1 // pred_fallthru
      _
    // Predicated region
    $region6: #{crossfield_smooth_loss.1} parent=1 // pred_check
      _
    $region7: #{crossfield_smooth_loss.1} parent=1 // pred_check_branch
      %20 = sbr.rel (0) target = $region9
    $region8: #{crossfield_smooth_loss.1} parent=1 // pred_region
      %21 = dma.done [#allocation4], 2048
    $region9: #{crossfield_smooth_loss.1} parent=1 // pred_fallthru
      _
    %v22 = vld [vmem:[#allocation3] sm:$0xff]
    %v23 = vld [vmem:[#allocation3 + $0x8] sm:$0xff]
    %v24 = vld [vmem:[#allocation3 + $0x10] sm:$0xff]
    %v25 = vld [vmem:[#allocation3 + $0x18] sm:$0xff]
    %v26 = vld [vmem:[#allocation3 + $0x20] sm:$0xff]
    %v27 = vld [vmem:[#allocation3 + $0x28] sm:$0xff]
    %v28 = vld [vmem:[#allocation3 + $0x30] sm:$0xff]
    %v29 = vld [vmem:[#allocation3 + $0x38] sm:$0xff]
    %v30 = vld [vmem:[#allocation3 + $0x40] sm:$0xff]
    %v31 = vld [vmem:[#allocation3 + $0x48] sm:$0xff]
    %v32 = vld [vmem:[#allocation3 + $0x50] sm:$0xff]
    %v33 = vld [vmem:[#allocation3 + $0x58] sm:$0xff]
    %v34 = vld [vmem:[#allocation3 + $0x60] sm:$0xff]
    %v35 = vld [vmem:[#allocation3 + $0x68] sm:$0xff]
    %v36 = vld [vmem:[#allocation3 + $0x70] sm:$0xff]
    %v37 = vld [vmem:[#allocation3 + $0x78] sm:$0xff]
    %vm38 = vcmask 146432
    %39 = vst.msk [vmem:[#allocation2] sm:$0xff] %vm38, 0.0
    %40 = vst.msk [vmem:[#allocation2 + $0x8] sm:$0xff] %vm38, 0.0
    %vm41 = vcmask 140288
    %42 = vst.msk [vmem:[#allocation2 + $0x10] sm:$0x3] %vm41, 0.0
    %43 = vst.msk [vmem:[#allocation2 + $0x18] sm:$0xff] %vm38, 0.0
    %44 = vst.msk [vmem:[#allocation2 + $0x20] sm:$0xff] %vm38, 0.0
    %45 = vst.msk [vmem:[#allocation2 + $0x28] sm:$0x3] %vm41, 0.0
    %46 = vst.msk [vmem:[#allocation2 + $0x30] sm:$0xff] %vm38, 0.0
    %47 = vst.msk [vmem:[#allocation2 + $0x38] sm:$0xff] %vm38, 0.0
    %48 = vst.msk [vmem:[#allocation2 + $0x40] sm:$0x3] %vm41, 0.0
    %49 = vst.msk [vmem:[#allocation2 + $0x48] sm:$0xff] %vm38, 0.0
    %50 = vst.msk [vmem:[#allocation2 + $0x50] sm:$0xff] %vm38, 0.0
    %51 = vst.msk [vmem:[#allocation2 + $0x58] sm:$0x3] %vm41, 0.0
    %52 = vst.msk [vmem:[#allocation2 + $0x60] sm:$0xff] %vm38, 0.0
    %53 = vst.msk [vmem:[#allocation2 + $0x68] sm:$0xff] %vm38, 0.0
    %54 = vst.msk [vmem:[#allocation2 + $0x70] sm:$0x3] %vm41, 0.0
    %55 = vst.msk [vmem:[#allocation2 + $0x78] sm:$0xff] %vm38, 0.0
    %56 = vst.msk [vmem:[#allocation2 + $0x80] sm:$0xff] %vm38, 0.0
    %57 = vst.msk [vmem:[#allocation2 + $0x88] sm:$0x3] %vm41, 0.0
    %58 = vst.msk [vmem:[#allocation2 + $0x90] sm:$0xff] %vm38, 0.0
    %59 = vst.msk [vmem:[#allocation2 + $0x98] sm:$0xff] %vm38, 0.0
    %60 = vst.msk [vmem:[#allocation2 + $0xa0] sm:$0x3] %vm41, 0.0
    %61 = vst.msk [vmem:[#allocation2 + $0xa8] sm:$0xff] %vm38, 0.0
    %62 = vst.msk [vmem:[#allocation2 + $0xb0] sm:$0xff] %vm38, 0.0
    %63 = vst.msk [vmem:[#allocation2 + $0xb8] sm:$0x3] %vm41, 0.0
    %80 = vrot.lane.b32.xlu0 %v22, 1
    %v81 = vpop.permute.xlu0 %80
    %82 = vrot.lane.b32.xlu0 %v23, 1
    %v83 = vpop.permute.xlu0 %82
    %84 = vrot.lane.b32.xlu0 %v24, 1
    %v85 = vpop.permute.xlu0 %84
    %86 = vrot.lane.b32.xlu0 %v25, 1
    %v87 = vpop.permute.xlu0 %86
    %88 = vrot.lane.b32.xlu0 %v26, 1
    %v89 = vpop.permute.xlu0 %88
    %90 = vrot.lane.b32.xlu0 %v27, 1
    %v91 = vpop.permute.xlu0 %90
    %92 = vrot.lane.b32.xlu0 %v28, 1
    %v93 = vpop.permute.xlu0 %92
    %94 = vrot.lane.b32.xlu0 %v29, 1
    %v95 = vpop.permute.xlu0 %94
    %96 = vrot.lane.b32.xlu0 %v30, 1
    %v97 = vpop.permute.xlu0 %96
    %98 = vrot.lane.b32.xlu0 %v31, 1
    %v99 = vpop.permute.xlu0 %98
    %100 = vrot.lane.b32.xlu0 %v32, 1
    %v101 = vpop.permute.xlu0 %100
    %102 = vrot.lane.b32.xlu0 %v33, 1
    %v103 = vpop.permute.xlu0 %102
    %104 = vrot.lane.b32.xlu0 %v34, 1
    %v105 = vpop.permute.xlu0 %104
    %106 = vrot.lane.b32.xlu0 %v35, 1
    %v107 = vpop.permute.xlu0 %106
    %108 = vrot.lane.b32.xlu0 %v36, 1
    %v109 = vpop.permute.xlu0 %108
    %110 = vrot.lane.b32.xlu0 %v37, 1
    %v111 = vpop.permute.xlu0 %110
    %vm128 = vcmask 138248
    %129 = vst.msk [vmem:[#allocation2 + $0x1] sm:$0xff] %vm128, %v81
    %130 = vst.msk [vmem:[#allocation2 + $0x9] sm:$0xff] %vm128, %v83
    %131 = vst.msk [vmem:[#allocation2 + $0x19] sm:$0xff] %vm128, %v85
    %132 = vst.msk [vmem:[#allocation2 + $0x21] sm:$0xff] %vm128, %v87
    %133 = vst.msk [vmem:[#allocation2 + $0x31] sm:$0xff] %vm128, %v89
    %134 = vst.msk [vmem:[#allocation2 + $0x39] sm:$0xff] %vm128, %v91
    %135 = vst.msk [vmem:[#allocation2 + $0x49] sm:$0xff] %vm128, %v93
    %136 = vst.msk [vmem:[#allocation2 + $0x51] sm:$0xff] %vm128, %v95
    %137 = vst.msk [vmem:[#allocation2 + $0x61] sm:$0xff] %vm128, %v97
    %138 = vst.msk [vmem:[#allocation2 + $0x69] sm:$0xff] %vm128, %v99
    %139 = vst.msk [vmem:[#allocation2 + $0x79] sm:$0xff] %vm128, %v101
    %140 = vst.msk [vmem:[#allocation2 + $0x81] sm:$0xff] %vm128, %v103
    %141 = vst.msk [vmem:[#allocation2 + $0x91] sm:$0xff] %vm128, %v105
    %142 = vst.msk [vmem:[#allocation2 + $0x99] sm:$0xff] %vm128, %v107
    %143 = vst.msk [vmem:[#allocation2 + $0xa9] sm:$0xff] %vm128, %v109
    %144 = vst.msk [vmem:[#allocation2 + $0xb1] sm:$0xff] %vm128, %v111
    %v145 = vld [vmem:[#allocation2] sm:$0xff]
    %v146 = vld [vmem:[#allocation2 + $0x8] sm:$0xff]
    %v147 = vld [vmem:[#allocation2 + $0x10] sm:$0x3]
    %v148 = vld [vmem:[#allocation2 + $0x18] sm:$0xff]
    %v149 = vld [vmem:[#allocation2 + $0x20] sm:$0xff]
    %v150 = vld [vmem:[#allocation2 + $0x28] sm:$0x3]
    %v151 = vld [vmem:[#allocation2 + $0x30] sm:$0xff]
    %v152 = vld [vmem:[#allocation2 + $0x38] sm:$0xff]
    %v153 = vld [vmem:[#allocation2 + $0x40] sm:$0x3]
    %v154 = vld [vmem:[#allocation2 + $0x48] sm:$0xff]
    %v155 = vld [vmem:[#allocation2 + $0x50] sm:$0xff]
    %v156 = vld [vmem:[#allocation2 + $0x58] sm:$0x3]
    %v157 = vld [vmem:[#allocation2 + $0x60] sm:$0xff]
    %v158 = vld [vmem:[#allocation2 + $0x68] sm:$0xff]
    %v159 = vld [vmem:[#allocation2 + $0x70] sm:$0x3]
    %v160 = vld [vmem:[#allocation2 + $0x78] sm:$0xff]
    %v161 = vld [vmem:[#allocation2 + $0x80] sm:$0xff]
    %v162 = vld [vmem:[#allocation2 + $0x88] sm:$0x3]
    %v163 = vld [vmem:[#allocation2 + $0x90] sm:$0xff]
    %v164 = vld [vmem:[#allocation2 + $0x98] sm:$0xff]
    %v165 = vld [vmem:[#allocation2 + $0xa0] sm:$0x3]
    %v166 = vld [vmem:[#allocation2 + $0xa8] sm:$0xff]
    %v167 = vld [vmem:[#allocation2 + $0xb0] sm:$0xff]
    %v168 = vld [vmem:[#allocation2 + $0xb8] sm:$0x3]
    %v169 = vadd.f32 %v145, %v145
    %v170 = vadd.f32 %v146, %v146
    %v171 = vadd.f32 %v147, %v147
    %v172 = vadd.f32 %v148, %v148
    %v173 = vadd.f32 %v149, %v149
    %v174 = vadd.f32 %v150, %v150
    %v175 = vadd.f32 %v151, %v151
    %v176 = vadd.f32 %v152, %v152
    %v177 = vadd.f32 %v153, %v153
    %v178 = vadd.f32 %v154, %v154
    %v179 = vadd.f32 %v155, %v155
    %v180 = vadd.f32 %v156, %v156
    %v181 = vadd.f32 %v157, %v157
    %v182 = vadd.f32 %v158, %v158
    %v183 = vadd.f32 %v159, %v159
    %v184 = vadd.f32 %v160, %v160
    %v185 = vadd.f32 %v161, %v161
    %v186 = vadd.f32 %v162, %v162
    %v187 = vadd.f32 %v163, %v163
    %v188 = vadd.f32 %v164, %v164
    %v189 = vadd.f32 %v165, %v165
    %v190 = vadd.f32 %v166, %v166
    %v191 = vadd.f32 %v167, %v167
    %v192 = vadd.f32 %v168, %v168
    %217 = vrot.lane.b32.xlu0 %v169, 127
    %v218 = vpop.permute.xlu0 %217
    %219 = vrot.lane.b32.xlu0 %v170, 127
    %v220 = vpop.permute.xlu0 %219
    %221 = vrot.lane.b32.xlu0 %v171, 127
    %v222 = vpop.permute.xlu0 %221
    %223 = vrot.lane.b32.xlu0 %v172, 127
    %v224 = vpop.permute.xlu0 %223
    %225 = vrot.lane.b32.xlu0 %v173, 127
    %v226 = vpop.permute.xlu0 %225
    %227 = vrot.lane.b32.xlu0 %v174, 127
    %v228 = vpop.permute.xlu0 %227
    %229 = vrot.lane.b32.xlu0 %v175, 127
    %v230 = vpop.permute.xlu0 %229
    %231 = vrot.lane.b32.xlu0 %v176, 127
    %v232 = vpop.permute.xlu0 %231
    %233 = vrot.lane.b32.xlu0 %v177, 127
    %v234 = vpop.permute.xlu0 %233
    %235 = vrot.lane.b32.xlu0 %v178, 127
    %v236 = vpop.permute.xlu0 %235
    %237 = vrot.lane.b32.xlu0 %v179, 127
    %v238 = vpop.permute.xlu0 %237
    %239 = vrot.lane.b32.xlu0 %v180, 127
    %v240 = vpop.permute.xlu0 %239
    %241 = vrot.lane.b32.xlu0 %v181, 127
    %v242 = vpop.permute.xlu0 %241
    %243 = vrot.lane.b32.xlu0 %v182, 127
    %v244 = vpop.permute.xlu0 %243
    %245 = vrot.lane.b32.xlu0 %v183, 127
    %v246 = vpop.permute.xlu0 %245
    %247 = vrot.lane.b32.xlu0 %v184, 127
    %v248 = vpop.permute.xlu0 %247
    %249 = vrot.lane.b32.xlu0 %v185, 127
    %v250 = vpop.permute.xlu0 %249
    %251 = vrot.lane.b32.xlu0 %v186, 127
    %v252 = vpop.permute.xlu0 %251
    %253 = vrot.lane.b32.xlu0 %v187, 127
    %v254 = vpop.permute.xlu0 %253
    %255 = vrot.lane.b32.xlu0 %v188, 127
    %v256 = vpop.permute.xlu0 %255
    %257 = vrot.lane.b32.xlu0 %v189, 127
    %v258 = vpop.permute.xlu0 %257
    %259 = vrot.lane.b32.xlu0 %v190, 127
    %v260 = vpop.permute.xlu0 %259
    %261 = vrot.lane.b32.xlu0 %v191, 127
    %v262 = vpop.permute.xlu0 %261
    %263 = vrot.lane.b32.xlu0 %v192, 127
    %v264 = vpop.permute.xlu0 %263
    %v289 = vadd.f32 %v145, %v218
    %v290 = vadd.f32 %v146, %v220
    %v291 = vadd.f32 %v147, %v222
    %v292 = vadd.f32 %v148, %v224
    %v293 = vadd.f32 %v149, %v226
    %v294 = vadd.f32 %v150, %v228
    %v295 = vadd.f32 %v151, %v230
    %v296 = vadd.f32 %v152, %v232
    %v297 = vadd.f32 %v153, %v234
    %v298 = vadd.f32 %v154, %v236
    %v299 = vadd.f32 %v155, %v238
    %v300 = vadd.f32 %v156, %v240
    %v301 = vadd.f32 %v157, %v242
    %v302 = vadd.f32 %v158, %v244
    %v303 = vadd.f32 %v159, %v246
    %v304 = vadd.f32 %v160, %v248
    %v305 = vadd.f32 %v161, %v250
    %v306 = vadd.f32 %v162, %v252
    %v307 = vadd.f32 %v163, %v254
    %v308 = vadd.f32 %v164, %v256
    %v309 = vadd.f32 %v165, %v258
    %v310 = vadd.f32 %v166, %v260
    %v311 = vadd.f32 %v167, %v262
    %v312 = vadd.f32 %v168, %v264
    %337 = vrot.lane.b32.xlu0 %v145, 126
    %v338 = vpop.permute.xlu0 %337
    %339 = vrot.lane.b32.xlu0 %v146, 126
    %v340 = vpop.permute.xlu0 %339
    %341 = vrot.lane.b32.xlu0 %v147, 126
    %v342 = vpop.permute.xlu0 %341
    %343 = vrot.lane.b32.xlu0 %v148, 126
    %v344 = vpop.permute.xlu0 %343
    %345 = vrot.lane.b32.xlu0 %v149, 126
    %v346 = vpop.permute.xlu0 %345
    %347 = vrot.lane.b32.xlu0 %v150, 126
    %v348 = vpop.permute.xlu0 %347
    %349 = vrot.lane.b32.xlu0 %v151, 126
    %v350 = vpop.permute.xlu0 %349
    %351 = vrot.lane.b32.xlu0 %v152, 126
    %v352 = vpop.permute.xlu0 %351
    %353 = vrot.lane.b32.xlu0 %v153, 126
    %v354 = vpop.permute.xlu0 %353
    %355 = vrot.lane.b32.xlu0 %v154, 126
    %v356 = vpop.permute.xlu0 %355
    %357 = vrot.lane.b32.xlu0 %v155, 126
    %v358 = vpop.permute.xlu0 %357
    %359 = vrot.lane.b32.xlu0 %v156, 126
    %v360 = vpop.permute.xlu0 %359
    %361 = vrot.lane.b32.xlu0 %v157, 126
    %v362 = vpop.permute.xlu0 %361
    %363 = vrot.lane.b32.xlu0 %v158, 126
    %v364 = vpop.permute.xlu0 %363
    %365 = vrot.lane.b32.xlu0 %v159, 126
    %v366 = vpop.permute.xlu0 %365
    %367 = vrot.lane.b32.xlu0 %v160, 126
    %v368 = vpop.permute.xlu0 %367
    %369 = vrot.lane.b32.xlu0 %v161, 126
    %v370 = vpop.permute.xlu0 %369
    %371 = vrot.lane.b32.xlu0 %v162, 126
    %v372 = vpop.permute.xlu0 %371
    %373 = vrot.lane.b32.xlu0 %v163, 126
    %v374 = vpop.permute.xlu0 %373
    %375 = vrot.lane.b32.xlu0 %v164, 126
    %v376 = vpop.permute.xlu0 %375
    %377 = vrot.lane.b32.xlu0 %v165, 126
    %v378 = vpop.permute.xlu0 %377
    %379 = vrot.lane.b32.xlu0 %v166, 126
    %v380 = vpop.permute.xlu0 %379
    %381 = vrot.lane.b32.xlu0 %v167, 126
    %v382 = vpop.permute.xlu0 %381
    %383 = vrot.lane.b32.xlu0 %v168, 126
    %v384 = vpop.permute.xlu0 %383
    %v409 = vadd.f32 %v289, %v338
    %v410 = vadd.f32 %v290, %v340
    %v411 = vadd.f32 %v291, %v342
    %v412 = vadd.f32 %v292, %v344
    %v413 = vadd.f32 %v293, %v346
    %v414 = vadd.f32 %v294, %v348
    %v415 = vadd.f32 %v295, %v350
    %v416 = vadd.f32 %v296, %v352
    %v417 = vadd.f32 %v297, %v354
    %v418 = vadd.f32 %v298, %v356
    %v419 = vadd.f32 %v299, %v358
    %v420 = vadd.f32 %v300, %v360
    %v421 = vadd.f32 %v301, %v362
    %v422 = vadd.f32 %v302, %v364
    %v423 = vadd.f32 %v303, %v366
    %v424 = vadd.f32 %v304, %v368
    %v425 = vadd.f32 %v305, %v370
    %v426 = vadd.f32 %v306, %v372
    %v427 = vadd.f32 %v307, %v374
    %v428 = vadd.f32 %v308, %v376
    %v429 = vadd.f32 %v309, %v378
    %v430 = vadd.f32 %v310, %v380
    %v431 = vadd.f32 %v311, %v382
    %v432 = vadd.f32 %v312, %v384
    %v433 = vadd.f32 %v409, %v409
    %v434 = vadd.f32 %v410, %v410
    %v435 = vadd.f32 %v411, %v411
    %v436 = vadd.f32 %v412, %v412
    %v437 = vadd.f32 %v413, %v413
    %v438 = vadd.f32 %v414, %v414
    %v439 = vadd.f32 %v415, %v415
    %v440 = vadd.f32 %v416, %v416
    %v441 = vadd.f32 %v417, %v417
    %v442 = vadd.f32 %v418, %v418
    %v443 = vadd.f32 %v419, %v419
    %v444 = vadd.f32 %v420, %v420
    %v445 = vadd.f32 %v421, %v421
    %v446 = vadd.f32 %v422, %v422
    %v447 = vadd.f32 %v423, %v423
    %v448 = vadd.f32 %v424, %v424
    %v449 = vadd.f32 %v425, %v425
    %v450 = vadd.f32 %v426, %v426
    %v451 = vadd.f32 %v427, %v427
    %v452 = vadd.f32 %v428, %v428
    %v453 = vadd.f32 %v429, %v429
    %v454 = vadd.f32 %v430, %v430
    %v455 = vadd.f32 %v431, %v431
    %v456 = vadd.f32 %v432, %v432
    %vm481 = vcmask 1046528
    %v482 = vrot.slane %v433, 1
    %v483 = vrot.slane %v434, 1
    %v484 = vsel %vm481, %v482, %v483
    %v485 = vrot.slane %v435, 1
    %v486 = vsel %vm481, %v483, %v485
    %v487 = vrot.slane %v436, 1
    %v488 = vrot.slane %v437, 1
    %v489 = vsel %vm481, %v487, %v488
    %v490 = vrot.slane %v438, 1
    %v491 = vsel %vm481, %v488, %v490
    %v492 = vrot.slane %v439, 1
    %v493 = vrot.slane %v440, 1
    %v494 = vsel %vm481, %v492, %v493
    %v495 = vrot.slane %v441, 1
    %v496 = vsel %vm481, %v493, %v495
    %v497 = vrot.slane %v442, 1
    %v498 = vrot.slane %v443, 1
    %v499 = vsel %vm481, %v497, %v498
    %v500 = vrot.slane %v444, 1
    %v501 = vsel %vm481, %v498, %v500
    %v502 = vrot.slane %v445, 1
    %v503 = vrot.slane %v446, 1
    %v504 = vsel %vm481, %v502, %v503
    %v505 = vrot.slane %v447, 1
    %v506 = vsel %vm481, %v503, %v505
    %v507 = vrot.slane %v448, 1
    %v508 = vrot.slane %v449, 1
    %v509 = vsel %vm481, %v507, %v508
    %v510 = vrot.slane %v450, 1
    %v511 = vsel %vm481, %v508, %v510
    %v512 = vrot.slane %v451, 1
    %v513 = vrot.slane %v452, 1
    %v514 = vsel %vm481, %v512, %v513
    %v515 = vrot.slane %v453, 1
    %v516 = vsel %vm481, %v513, %v515
    %v517 = vrot.slane %v454, 1
    %v518 = vrot.slane %v455, 1
    %v519 = vsel %vm481, %v517, %v518
    %v520 = vrot.slane %v456, 1
    %v521 = vsel %vm481, %v518, %v520
    %v538 = vadd.f32 %v409, %v484
    %v539 = vadd.f32 %v410, %v486
    %v540 = vadd.f32 %v412, %v489
    %v541 = vadd.f32 %v413, %v491
    %v542 = vadd.f32 %v415, %v494
    %v543 = vadd.f32 %v416, %v496
    %v544 = vadd.f32 %v418, %v499
    %v545 = vadd.f32 %v419, %v501
    %v546 = vadd.f32 %v421, %v504
    %v547 = vadd.f32 %v422, %v506
    %v548 = vadd.f32 %v424, %v509
    %v549 = vadd.f32 %v425, %v511
    %v550 = vadd.f32 %v427, %v514
    %v551 = vadd.f32 %v428, %v516
    %v552 = vadd.f32 %v430, %v519
    %v553 = vadd.f32 %v431, %v521
    %vm578 = vcmask 1045504
    %v579 = vrot.slane %v409, 2
    %v580 = vrot.slane %v410, 2
    %v581 = vsel %vm578, %v579, %v580
    %v582 = vrot.slane %v411, 2
    %v583 = vsel %vm578, %v580, %v582
    %v584 = vrot.slane %v412, 2
    %v585 = vrot.slane %v413, 2
    %v586 = vsel %vm578, %v584, %v585
    %v587 = vrot.slane %v414, 2
    %v588 = vsel %vm578, %v585, %v587
    %v589 = vrot.slane %v415, 2
    %v590 = vrot.slane %v416, 2
    %v591 = vsel %vm578, %v589, %v590
    %v592 = vrot.slane %v417, 2
    %v593 = vsel %vm578, %v590, %v592
    %v594 = vrot.slane %v418, 2
    %v595 = vrot.slane %v419, 2
    %v596 = vsel %vm578, %v594, %v595
    %v597 = vrot.slane %v420, 2
    %v598 = vsel %vm578, %v595, %v597
    %v599 = vrot.slane %v421, 2
    %v600 = vrot.slane %v422, 2
    %v601 = vsel %vm578, %v599, %v600
    %v602 = vrot.slane %v423, 2
    %v603 = vsel %vm578, %v600, %v602
    %v604 = vrot.slane %v424, 2
    %v605 = vrot.slane %v425, 2
    %v606 = vsel %vm578, %v604, %v605
    %v607 = vrot.slane %v426, 2
    %v608 = vsel %vm578, %v605, %v607
    %v609 = vrot.slane %v427, 2
    %v610 = vrot.slane %v428, 2
    %v611 = vsel %vm578, %v609, %v610
    %v612 = vrot.slane %v429, 2
    %v613 = vsel %vm578, %v610, %v612
    %v614 = vrot.slane %v430, 2
    %v615 = vrot.slane %v431, 2
    %v616 = vsel %vm578, %v614, %v615
    %v617 = vrot.slane %v432, 2
    %v618 = vsel %vm578, %v615, %v617
    %v635 = vadd.f32 %v538, %v581
    %v636 = vadd.f32 %v539, %v583
    %v637 = vadd.f32 %v540, %v586
    %v638 = vadd.f32 %v541, %v588
    %v639 = vadd.f32 %v542, %v591
    %v640 = vadd.f32 %v543, %v593
    %v641 = vadd.f32 %v544, %v596
    %v642 = vadd.f32 %v545, %v598
    %v643 = vadd.f32 %v546, %v601
    %v644 = vadd.f32 %v547, %v603
    %v645 = vadd.f32 %v548, %v606
    %v646 = vadd.f32 %v549, %v608
    %v647 = vadd.f32 %v550, %v611
    %v648 = vadd.f32 %v551, %v613
    %v649 = vadd.f32 %v552, %v616
    %v650 = vadd.f32 %v553, %v618
    %v651 = vmul.f32 %v635, 0.5
    %v652 = vmul.f32 %v636, 0.5
    %v653 = vmul.f32 %v637, 0.5
    %v654 = vmul.f32 %v638, 0.5
    %v655 = vmul.f32 %v639, 0.5
    %v656 = vmul.f32 %v640, 0.5
    %v657 = vmul.f32 %v641, 0.5
    %v658 = vmul.f32 %v642, 0.5
    %v659 = vmul.f32 %v643, 0.5
    %v660 = vmul.f32 %v644, 0.5
    %v661 = vmul.f32 %v645, 0.5
    %v662 = vmul.f32 %v646, 0.5
    %v663 = vmul.f32 %v647, 0.5
    %v664 = vmul.f32 %v648, 0.5
    %v665 = vmul.f32 %v649, 0.5
    %v666 = vmul.f32 %v650, 0.5
    %v667 = vmul.f32 %v22, 8.0
    %v668 = vmul.f32 %v23, 8.0
    %v669 = vmul.f32 %v24, 8.0
    %v670 = vmul.f32 %v25, 8.0
    %v671 = vmul.f32 %v26, 8.0
    %v672 = vmul.f32 %v27, 8.0
    %v673 = vmul.f32 %v28, 8.0
    %v674 = vmul.f32 %v29, 8.0
    %v675 = vmul.f32 %v30, 8.0
    %v676 = vmul.f32 %v31, 8.0
    %v677 = vmul.f32 %v32, 8.0
    %v678 = vmul.f32 %v33, 8.0
    %v679 = vmul.f32 %v34, 8.0
    %v680 = vmul.f32 %v35, 8.0
    %v681 = vmul.f32 %v36, 8.0
    %v682 = vmul.f32 %v37, 8.0
    %v683 = vsub.f32 %v651, %v667
    %v684 = vsub.f32 %v652, %v668
    %v685 = vsub.f32 %v653, %v669
    %v686 = vsub.f32 %v654, %v670
    %v687 = vsub.f32 %v655, %v671
    %v688 = vsub.f32 %v656, %v672
    %v689 = vsub.f32 %v657, %v673
    %v690 = vsub.f32 %v658, %v674
    %v691 = vsub.f32 %v659, %v675
    %v692 = vsub.f32 %v660, %v676
    %v693 = vsub.f32 %v661, %v677
    %v694 = vsub.f32 %v662, %v678
    %v695 = vsub.f32 %v663, %v679
    %v696 = vsub.f32 %v664, %v680
    %v697 = vsub.f32 %v665, %v681
    %v698 = vsub.f32 %v666, %v682
    %v699 = vand.u32 2147483647, %v683
    %v700 = vand.u32 2147483647, %v684
    %v701 = vand.u32 2147483647, %v685
    %v702 = vand.u32 2147483647, %v686
    %v703 = vand.u32 2147483647, %v687
    %v704 = vand.u32 2147483647, %v688
    %v705 = vand.u32 2147483647, %v689
    %v706 = vand.u32 2147483647, %v690
    %v707 = vand.u32 2147483647, %v691
    %v708 = vand.u32 2147483647, %v692
    %v709 = vand.u32 2147483647, %v693
    %v710 = vand.u32 2147483647, %v694
    %v711 = vand.u32 2147483647, %v695
    %v712 = vand.u32 2147483647, %v696
    %v713 = vand.u32 2147483647, %v697
    %v714 = vand.u32 2147483647, %v698
    %vm715 = vcmask 130048
    %v716 = vsel %vm715, %v699, 0.0
    %v717 = vsel %vm715, %v700, 0.0
    %v718 = vadd.f32 %v716, %v717
    %v719 = vsel %vm715, %v701, 0.0
    %v720 = vadd.f32 %v718, %v719
    %v721 = vsel %vm715, %v702, 0.0
    %v722 = vadd.f32 %v720, %v721
    %v723 = vsel %vm715, %v703, 0.0
    %v724 = vadd.f32 %v722, %v723
    %v725 = vsel %vm715, %v704, 0.0
    %v726 = vadd.f32 %v724, %v725
    %v727 = vsel %vm715, %v705, 0.0
    %v728 = vadd.f32 %v726, %v727
    %v729 = vsel %vm715, %v706, 0.0
    %v730 = vadd.f32 %v728, %v729
    %v731 = vsel %vm715, %v707, 0.0
    %v732 = vadd.f32 %v730, %v731
    %v733 = vsel %vm715, %v708, 0.0
    %v734 = vadd.f32 %v732, %v733
    %v735 = vsel %vm715, %v709, 0.0
    %v736 = vadd.f32 %v734, %v735
    %v737 = vsel %vm715, %v710, 0.0
    %v738 = vadd.f32 %v736, %v737
    %v739 = vsel %vm715, %v711, 0.0
    %v740 = vadd.f32 %v738, %v739
    %v741 = vsel %vm715, %v712, 0.0
    %v742 = vadd.f32 %v740, %v741
    %v743 = vsel %vm715, %v713, 0.0
    %v744 = vadd.f32 %v742, %v743
    %v745 = vsel %vm715, %v714, 0.0
    %v746 = vadd.f32 %v744, %v745
    %747 = vadd.xlane.f32.xlu0 %v746
    %v748 = vpop.xlane.xlu0 %747
    %v749 = vrot.slane %v748, 4
    %v750 = vadd.f32 %v748, %v749
    %v751 = vrot.slane %v750, 2
    %v752 = vadd.f32 %v750, %v751
    %v753 = vrot.slane %v752, 1
    %v754 = vadd.f32 %v752, %v753
    %s755 = vtos %v754
    %v756 = vstv %s755
    %757 = vst [vmem:[%s1] sm:$0xff] %v756
    // Predicated region
    $region10: #{crossfield_smooth_loss.1} parent=1 // pred_check
      _
    $region11: #{crossfield_smooth_loss.1} parent=1 // pred_check_branch
      %759 = sbr.rel (0) target = $region13
    $region12: #{crossfield_smooth_loss.1} parent=1 // pred_region
      _
    $region13: #{crossfield_smooth_loss.1} parent=1 // pred_fallthru
      _
    // Predicated region
    $region14: #{crossfield_smooth_loss.1} parent=1 // pred_check
      _
    $region15: #{crossfield_smooth_loss.1} parent=1 // pred_check_branch
      %761 = sbr.rel (0) target = $region17
    $region16: #{crossfield_smooth_loss.1} parent=1 // pred_region
      _
    $region17: #{crossfield_smooth_loss.1} parent=1 // pred_fallthru
      _
    %762 = vsyncpa [#allocation4], 1

</llo_original>
